<compile_context>
chip_gen: v7x
topology: tpu7x:2x2x1
jax: 0.10.0
libtpu: 0.0.40
codegen_flags: <defaults>
</compile_context>

<pallas_src>
import jax
import jax.numpy as jnp
from jax.experimental import pallas as pl
from jax.experimental.pallas import tpu as pltpu


def bahdanau_kernel(b_ref, wtt_ref, blkmask_ref, vsel_ref, bsel_ref, o_ref):
    """One grid step processes a block of Bb batch elements.

    b_ref      : (Bb, N, E)   input rows for this batch block
    wtt_ref    : (E, N*E)     W^T tiled N times along lanes: wtt[f, k*E+e] = W[e, f]
    blkmask_ref: (N, N*E)     blkmask[r, k*E+e] = (r == k)
    vsel_ref   : (N*E, N)     vsel[k*E+e, k'] = v[e] * (k == k')
    bsel_ref   : (E, N*E)     bsel[f, k*E+e]  = (f == e)     (lane-tiling identity)
    o_ref      : (Bb, N*E)    lane-dense output: o[b, q*E+e] = C[b, q, e]
    """
    Bb, N, E = b_ref.shape
    NE = N * E

    B3 = b_ref[...]                                       # (Bb, N, E)
    Brows = B3.reshape(Bb * N, E)                         # leading-dim merge (layout-safe)
    blkmask = blkmask_ref[...]                            # (N, NE)

    # Projection fused with tile-along-lanes: t1[(b,q), k*E+e] = Wb[b,q,e]  (MXU).
    t1 = jnp.dot(Brows, wtt_ref[...], preferred_element_type=jnp.float32)   # (Bb*N, NE)
    t1_3 = t1.reshape(Bb, N, NE)

    # Key-side rows, lane-dense: wflat[b, 0, k*E+e] = Wb[b,k,e]  (VPU mask + sublane sum).
    wflat = jnp.sum(t1_3 * blkmask, axis=1, keepdims=True)                  # (Bb, 1, NE)

    # Pairwise tanh on full 128-lane vregs (EUP): pair[b,q,k*E+e] = tanh(Wb[b,q,e]+Wb[b,k,e]).
    pair = jnp.tanh(t1_3 + wflat)                                           # (Bb, N, NE)

    # scores[b, q, k] = sum_e v[e] * pair[b, q, k*E+e]   (MXU; symmetric in (q, k)).
    scores = jnp.dot(pair.reshape(Bb * N, NE), vsel_ref[...],
                     preferred_element_type=jnp.float32)                    # (Bb*N, N)
    scores3 = scores.reshape(Bb, N, N)

    # Softmax over keys.  scores is symmetric, so the per-query max / denominator can be
    # taken over sublanes, which leaves the query index q in the lane dim (no transpose):
    #   F[b, k, q] = exp(scores[b, q, k] - max_k scores[b, q, k]);   Fn[b, k, q] = attn[b, q, k]
    qmax = jnp.max(scores3, axis=1, keepdims=True)                          # (Bb, 1, N)
    F = jnp.exp(scores3 - qmax)                                             # (Bb, N, N)
    denom = jnp.sum(F, axis=1, keepdims=True)                               # (Bb, 1, N)
    Fn = F * pl.reciprocal(denom, approx=True)                              # EUP recip

    # Broadcast attn over the E lanes of each block: A[b, k, q*E+e] = attn[b, q, k]  (MXU).
    A = jnp.dot(Fn.reshape(Bb * N, N), blkmask,
                preferred_element_type=jnp.float32).reshape(Bb, N, NE)

    # Value tiling: Btile[b, k, q*E+e] = B[b, k, e]  (MXU).
    Btile = jnp.dot(Brows, bsel_ref[...],
                    preferred_element_type=jnp.float32).reshape(Bb, N, NE)

    # C[b, q, e] = sum_k attn[b, q, k] * B[b, k, e] -> lane-dense (Bb, NE) store (full vst).
    o_ref[...] = jnp.sum(A * Btile, axis=1).astype(o_ref.dtype)


def bahdanau_self_attention(B, W, v, block_batch=None):
    """B: (batch, N, E); W: (E, E) nn.Linear weight (PyTorch convention, y = x @ W.T);
    v: (E,). Returns C: (batch, N, E)."""
    batch, N, E = B.shape
    NE = N * E
    dtype = B.dtype

    # ---- choose the batch block size Bb ---------------------------------------------------
    # Target Bb*N >= 128 rows per grid step (MXU sublane fill, amortizes ~0.35us/step
    # overhead), bounded by a VMEM budget for the lane-dense (N, N*E) intermediates
    # (~5 live f32 copies per batch element).  Budget kept conservative for v7x (64 MiB VMEM).
    vmem_budget_bytes = 8 * 1024 * 1024
    per_batch_elem = 5 * N * NE * 4
    max_bb_vmem = max(1, vmem_budget_bytes // per_batch_elem)
    if block_batch is None:
        block_batch = max(1, pl.cdiv(128, N))
    Bb = int(min(batch, block_batch, max_bb_vmem))
    if Bb < batch:
        # (Bb, N*E) output block: keep the sublane dim a multiple of 8 when it is not the
        # full array extent.
        Bb = int(min(batch, pl.cdiv(Bb, 8) * 8))
    steps = int(pl.cdiv(batch, Bb))
    batch_pad = steps * Bb
    # TODO(synk): for very large N (N*N*E*4 >> VMEM even at Bb=1), additionally chunk the
    # lane-dense pairwise tensor over query rows inside the kernel.

    Bp = B if batch_pad == batch else jnp.pad(B, ((0, batch_pad - batch), (0, 0), (0, 0)))

    # ---- host-side lane-dense constants (built once per call) ------------------------------
    Wt = W.T.astype(dtype)                                                       # y = x @ Wt
    wtt = jnp.tile(Wt, (1, N))                                                   # (E, N*E)
    blkmask = jnp.kron(jnp.eye(N, dtype=dtype), jnp.ones((1, E), dtype=dtype))   # (N, N*E)
    vsel = jnp.kron(jnp.eye(N, dtype=dtype), v.astype(dtype).reshape(E, 1))      # (N*E, N)
    bsel = jnp.tile(jnp.eye(E, dtype=dtype), (1, N))                             # (E, N*E)

    flops = batch_pad * (2 * N * E * NE        # projection + lane-tiling matmul
                         + 2 * N * NE * N      # v-weighted score matmul
                         + 2 * N * N * NE      # attn lane-broadcast matmul
                         + 2 * N * E * NE      # value lane-tiling matmul
                         + 6 * N * NE)         # elementwise add/mask/mul/reduce
    transcendentals = batch_pad * (N * NE + N * N)          # tanh + exp
    bytes_accessed = 4 * (Bp.size + batch_pad * NE
                          + wtt.size + blkmask.size + vsel.size + bsel.size)

    out = pl.pallas_call(
        bahdanau_kernel,
        out_shape=jax.ShapeDtypeStruct((batch_pad, NE), dtype),
        grid_spec=pltpu.PrefetchScalarGridSpec(
            num_scalar_prefetch=0,
            grid=(steps,),
            in_specs=[
                pl.BlockSpec((Bb, N, E), lambda b: (b, 0, 0)),
                pl.BlockSpec((E, NE), lambda b: (0, 0)),
                pl.BlockSpec((N, NE), lambda b: (0, 0)),
                pl.BlockSpec((NE, N), lambda b: (0, 0)),
                pl.BlockSpec((E, NE), lambda b: (0, 0)),
            ],
            out_specs=pl.BlockSpec((Bb, NE), lambda b: (b, 0)),
        ),
        compiler_params=pltpu.CompilerParams(
            dimension_semantics=("parallel",),        # batch grid axis shards across TCs
            vmem_limit_bytes=32 * 1024 * 1024,        # safe on v5e/v6e (128 MiB) and v7x (64 MiB)
        ),
        cost_estimate=pl.CostEstimate(
            flops=int(flops),
            transcendentals=int(transcendentals),
            bytes_accessed=int(bytes_accessed),
        ),
    )(Bp, wtt, blkmask, vsel, bsel)

    return out.reshape(batch_pad, N, E)[:batch]


def bahdanau_reference(B, W, v):
    Wb = jnp.einsum('bne,fe->bnf', B, W)                       # Linear(B), weight W (E_out, E_in)
    pair = jnp.tanh(Wb[:, None, :, :] + Wb[:, :, None, :])     # (batch, N, N, E)
    scores = jnp.sum(v * pair, axis=-1)                        # (batch, N, N)
    attn = jax.nn.softmax(scores, axis=-1)
    return jnp.einsum('bij,bje->bie', attn, B)


if __name__ == "__main__":
    batch, num_classes, embedding_size = 2, 8, 32

    key = jax.random.PRNGKey(0)
    kB, kW, kv = jax.random.split(key, 3)

    # Deterministic init mimicking the module's __init__:
    # nn.Linear(E, E, bias=False) -> uniform(-1/sqrt(E), 1/sqrt(E)); v = rand(E) in [0,1)
    bound = 1.0 / (embedding_size ** 0.5)
    W = jax.random.uniform(kW, (embedding_size, embedding_size),
                           minval=-bound, maxval=bound, dtype=jnp.float32)
    v = jax.random.uniform(kv, (embedding_size,), dtype=jnp.float32)
    B = jax.random.normal(kB, (batch, num_classes, embedding_size), dtype=jnp.float32)

    C = bahdanau_self_attention(B, W, v)
    C = jax.block_until_ready(C)

    C_ref = bahdanau_reference(B, W, v)
    assert C.shape == (batch, num_classes, embedding_size)
    # 2e-3 tolerance accounts for the EUP approximate-reciprocal softmax normalization;
    # all other math is f32 and exact up to matmul/reduction rounding.
    assert jnp.allclose(C, C_ref, atol=2e-3, rtol=2e-3), "mismatch vs reference"

    print("KERNEL_OK")
</pallas_src>

<mosaic_0001>
module attributes {stable_mosaic.version = 11 : i64} {
  func.func @bahdanau_kernel(%arg0: i32, %arg1: memref<2x8x32xf32, #tpu.memory_space<vmem>>, %arg2: memref<32x256xf32, #tpu.memory_space<vmem>>, %arg3: memref<8x256xf32, #tpu.memory_space<vmem>>, %arg4: memref<256x8xf32, #tpu.memory_space<vmem>>, %arg5: memref<32x256xf32, #tpu.memory_space<vmem>>, %arg6: memref<2x256xf32, #tpu.memory_space<vmem>>) attributes {dimension_semantics = [#tpu.dimension_semantics<parallel>], iteration_bounds = array<i64: 1>, scalar_prefetch = 0 : i64, scratch_operands = 0 : i64, tpu.core_type = #tpu.core_type<tc>, window_params = [{transform_indices = @transform_0, window_bounds = array<i64: 2, 8, 32>}, {pipeline_mode = #tpu.pipeline_mode<synchronous>, transform_indices = @transform_1, window_bounds = array<i64: 32, 256>}, {pipeline_mode = #tpu.pipeline_mode<synchronous>, transform_indices = @transform_2, window_bounds = array<i64: 8, 256>}, {pipeline_mode = #tpu.pipeline_mode<synchronous>, transform_indices = @transform_3, window_bounds = array<i64: 256, 8>}, {pipeline_mode = #tpu.pipeline_mode<synchronous>, transform_indices = @transform_4, window_bounds = array<i64: 32, 256>}, {transform_indices = @transform_5, window_bounds = array<i64: 2, 256>}]} {
    %c0 = arith.constant 0 : index
    %c0_0 = arith.constant 0 : index
    %c0_1 = arith.constant 0 : index
    %0 = vector.load %arg1[%c0, %c0_0, %c0_1] : memref<2x8x32xf32, #tpu.memory_space<vmem>>, vector<2x8x32xf32>
    %1 = vector.shape_cast %0 : vector<2x8x32xf32> to vector<16x32xf32>
    %c0_2 = arith.constant 0 : index
    %c0_3 = arith.constant 0 : index
    %2 = vector.load %arg3[%c0_2, %c0_3] : memref<8x256xf32, #tpu.memory_space<vmem>>, vector<8x256xf32>
    %c0_4 = arith.constant 0 : index
    %c0_5 = arith.constant 0 : index
    %3 = vector.load %arg2[%c0_4, %c0_5] : memref<32x256xf32, #tpu.memory_space<vmem>>, vector<32x256xf32>
    %cst = arith.constant dense<0.000000e+00> : vector<16x256xf32>
    %4 = tpu.matmul %1, %3, %cst {dimension_numbers = #tpu.dot_dimension_numbers<[1], [0], [0], [1], [0, 0, 1, 1], [], []>} : vector<16x32xf32>, vector<32x256xf32>, vector<16x256xf32> -> vector<16x256xf32>
    %5 = vector.shape_cast %4 : vector<16x256xf32> to vector<2x8x256xf32>
    %6 = vector.shape_cast %2 : vector<8x256xf32> to vector<1x8x256xf32>
    %7 = vector.broadcast %6 : vector<1x8x256xf32> to vector<2x8x256xf32>
    %8 = arith.mulf %5, %7 : vector<2x8x256xf32>
    %cst_6 = arith.constant dense<0.000000e+00> : vector<2x256xf32>
    %9 = vector.multi_reduction <add>, %8, %cst_6 [1] : vector<2x8x256xf32> to vector<2x256xf32>
    %10 = vector.shape_cast %9 : vector<2x256xf32> to vector<2x1x256xf32>
    %11 = vector.broadcast %10 : vector<2x1x256xf32> to vector<2x8x256xf32>
    %12 = arith.addf %5, %11 : vector<2x8x256xf32>
    %13 = math.tanh %12 : vector<2x8x256xf32>
    %14 = vector.shape_cast %13 : vector<2x8x256xf32> to vector<16x256xf32>
    %c0_7 = arith.constant 0 : index
    %c0_8 = arith.constant 0 : index
    %15 = vector.load %arg4[%c0_7, %c0_8] : memref<256x8xf32, #tpu.memory_space<vmem>>, vector<256x8xf32>
    %cst_9 = arith.constant dense<0.000000e+00> : vector<16x8xf32>
    %16 = tpu.matmul %14, %15, %cst_9 {dimension_numbers = #tpu.dot_dimension_numbers<[1], [0], [0], [1], [0, 0, 1, 1], [], []>} : vector<16x256xf32>, vector<256x8xf32>, vector<16x8xf32> -> vector<16x8xf32>
    %17 = vector.shape_cast %16 : vector<16x8xf32> to vector<2x8x8xf32>
    %cst_10 = arith.constant dense<0xFF800000> : vector<2x8xf32>
    %18 = vector.multi_reduction <maximumf>, %17, %cst_10 [1] : vector<2x8x8xf32> to vector<2x8xf32>
    %19 = vector.shape_cast %18 : vector<2x8xf32> to vector<2x1x8xf32>
    %20 = vector.broadcast %19 : vector<2x1x8xf32> to vector<2x8x8xf32>
    %21 = arith.subf %17, %20 : vector<2x8x8xf32>
    %22 = math.exp %21 : vector<2x8x8xf32>
    %cst_11 = arith.constant dense<0.000000e+00> : vector<2x8xf32>
    %23 = vector.multi_reduction <add>, %22, %cst_11 [1] : vector<2x8x8xf32> to vector<2x8xf32>
    %24 = vector.shape_cast %23 : vector<2x8xf32> to vector<2x1x8xf32>
    %25 = tpu.reciprocal %24 {approx = true} : vector<2x1x8xf32> -> vector<2x1x8xf32>
    %26 = vector.broadcast %25 : vector<2x1x8xf32> to vector<2x8x8xf32>
    %27 = arith.mulf %22, %26 : vector<2x8x8xf32>
    %28 = vector.shape_cast %27 : vector<2x8x8xf32> to vector<16x8xf32>
    %cst_12 = arith.constant dense<0.000000e+00> : vector<16x256xf32>
    %29 = tpu.matmul %28, %2, %cst_12 {dimension_numbers = #tpu.dot_dimension_numbers<[1], [0], [0], [1], [0, 0, 1, 1], [], []>} : vector<16x8xf32>, vector<8x256xf32>, vector<16x256xf32> -> vector<16x256xf32>
    %30 = vector.shape_cast %29 : vector<16x256xf32> to vector<2x8x256xf32>
    %c0_13 = arith.constant 0 : index
    %c0_14 = arith.constant 0 : index
    %31 = vector.load %arg5[%c0_13, %c0_14] : memref<32x256xf32, #tpu.memory_space<vmem>>, vector<32x256xf32>
    %cst_15 = arith.constant dense<0.000000e+00> : vector<16x256xf32>
    %32 = tpu.matmul %1, %31, %cst_15 {dimension_numbers = #tpu.dot_dimension_numbers<[1], [0], [0], [1], [0, 0, 1, 1], [], []>} : vector<16x32xf32>, vector<32x256xf32>, vector<16x256xf32> -> vector<16x256xf32>
    %33 = vector.shape_cast %32 : vector<16x256xf32> to vector<2x8x256xf32>
    %34 = arith.mulf %30, %33 : vector<2x8x256xf32>
    %cst_16 = arith.constant dense<0.000000e+00> : vector<2x256xf32>
    %35 = vector.multi_reduction <add>, %34, %cst_16 [1] : vector<2x8x256xf32> to vector<2x256xf32>
    %c0_17 = arith.constant 0 : index
    %c0_18 = arith.constant 0 : index
    %36 = vector.load %arg6[%c0_17, %c0_18] : memref<2x256xf32, #tpu.memory_space<vmem>>, vector<2x256xf32>
    tpu.vector_store %arg6[%c0_17, %c0_18], %35 {strides = array<i32>} : memref<2x256xf32, #tpu.memory_space<vmem>>, vector<2x256xf32>,
    return
  }
  func.func @transform_0(%arg0: i32) -> (i32, i32, i32) {
    %c0_i32 = arith.constant 0 : i32
    %c0_i32_0 = arith.constant 0 : i32
    %c0_i32_1 = arith.constant 0 : i32
    return %arg0, %c0_i32, %c0_i32_0 : i32, i32, i32
  }
  func.func @transform_1(%arg0: i32) -> (i32, i32) {
    %c0_i32 = arith.constant 0 : i32
    %c0_i32_0 = arith.constant 0 : i32
    %c0_i32_1 = arith.constant 0 : i32
    return %c0_i32, %c0_i32_0 : i32, i32
  }
  func.func @transform_2(%arg0: i32) -> (i32, i32) {
    %c0_i32 = arith.constant 0 : i32
    %c0_i32_0 = arith.constant 0 : i32
    %c0_i32_1 = arith.constant 0 : i32
    return %c0_i32, %c0_i32_0 : i32, i32
  }
  func.func @transform_3(%arg0: i32) -> (i32, i32) {
    %c0_i32 = arith.constant 0 : i32
    %c0_i32_0 = arith.constant 0 : i32
    %c0_i32_1 = arith.constant 0 : i32
    return %c0_i32, %c0_i32_0 : i32, i32
  }
  func.func @transform_4(%arg0: i32) -> (i32, i32) {
    %c0_i32 = arith.constant 0 : i32
    %c0_i32_0 = arith.constant 0 : i32
    %c0_i32_1 = arith.constant 0 : i32
    return %c0_i32, %c0_i32_0 : i32, i32
  }
  func.func @transform_5(%arg0: i32) -> (i32, i32) {
    %c0_i32 = arith.constant 0 : i32
    %c0_i32_0 = arith.constant 0 : i32
    return %arg0, %c0_i32 : i32, i32
  }
}

</mosaic_0001>

<llo_original>
// kernel: tpu_custom_call.1
$region0: #{tpu_custom_call.1}
  #allocation0 [shape = 'u32[]', space=smem, size = 0x4, offset = 0x4, fixed_abs, tag = 'smem constant byte address 0x4 - core index']
  #allocation1 [shape = 'u32[144,128]{1,0:T(1,128)}', space=vmem, size = 0x12000, scoped, tag = 'internal scratch']
  %s0 = inlined_call_operand.vmem [shape: f32[2,8,32], index: 0, kind: input, shape index: {}]
  %s1 = inlined_call_operand.vmem [shape: f32[32,256], index: 1, kind: input, shape index: {}]
  %s2 = inlined_call_operand.vmem [shape: f32[8,256], index: 2, kind: input, shape index: {}]
  %s3 = inlined_call_operand.vmem [shape: f32[256,8], index: 3, kind: input, shape index: {}]
  %s4 = inlined_call_operand.vmem [shape: f32[32,256], index: 4, kind: input, shape index: {}]
  %s5 = inlined_call_operand.hbm [shape: f32[2,256], index: 5, kind: output, shape index: {}]
  %s6 = sld [smem:[#allocation0]]
  $region30: #{tpu_custom_call.1} parent=0
    _
  %s8 = ssub.s32 1, %s6
  %s9 = scalar_select 0, %s8, %s6
  $region1: #{tpu_custom_call.1} parent=0
    #allocation2 [shape = 'u8[2048]{0}', space=vmem, size = 0x800, scoped, tag = 'output window, operand 0, single buffered']
    #allocation3 [shape = 's32[1]{0}', space=sflag, size = 0x4, scoped, tag = 'scoped memory for tpu_custom_call.1']
    %10 = vsyncpa [#allocation3], 0
    // Predicated region
    $region2: #{tpu_custom_call.1} parent=1 // pred_check
      _
    $region3: #{tpu_custom_call.1} parent=1 // pred_check_branch
      %12 = sbr.rel (0) target = $region5
    $region4: #{tpu_custom_call.1} parent=1 // pred_region
      _
    $region5: #{tpu_custom_call.1} parent=1 // pred_fallthru
      _
    // Predicated region
    $region6: #{tpu_custom_call.1} parent=1 // pred_check
      _
    $region7: #{tpu_custom_call.1} parent=1 // pred_check_branch
      %14 = sbr.rel (0) target = $region9
    $region8: #{tpu_custom_call.1} parent=1 // pred_region
      _
    $region9: #{tpu_custom_call.1} parent=1 // pred_fallthru
      _
    // Predicated region
    $region10: #{tpu_custom_call.1} parent=1 // pred_check
      _
    $region11: #{tpu_custom_call.1} parent=1 // pred_check_branch
      %16 = sbr.rel (0) target = $region13
    $region12: #{tpu_custom_call.1} parent=1 // pred_region
      _
    $region13: #{tpu_custom_call.1} parent=1 // pred_fallthru
      _
    // Predicated region
    $region14: #{tpu_custom_call.1} parent=1 // pred_check
      _
    $region15: #{tpu_custom_call.1} parent=1 // pred_check_branch
      %18 = sbr.rel (0) target = $region17
    $region16: #{tpu_custom_call.1} parent=1 // pred_region
      _
    $region17: #{tpu_custom_call.1} parent=1 // pred_fallthru
      _
    // Predicated region
    $region18: #{tpu_custom_call.1} parent=1 // pred_check
      _
    $region19: #{tpu_custom_call.1} parent=1 // pred_check_branch
      %20 = sbr.rel (0) target = $region21
    $region20: #{tpu_custom_call.1} parent=1 // pred_region
      _
    $region21: #{tpu_custom_call.1} parent=1 // pred_fallthru
      _
    %v21 = vld [vmem:[%s0] sm:$0xff]
    %v22 = vld [vmem:[%s0 + $0x8] sm:$0xff]
    %v23 = vld [vmem:[%s2] sm:$0xff]
    %v24 = vld [vmem:[%s2 + $0x8] sm:$0xff]
    %v25 = vld [vmem:[%s1] sm:$0xff]
    %v26 = vld [vmem:[%s1 + $0x8] sm:$0xff]
    %v27 = vld [vmem:[%s1 + $0x10] sm:$0xff]
    %v28 = vld [vmem:[%s1 + $0x18] sm:$0xff]
    %v29 = vld [vmem:[%s1 + $0x20] sm:$0xff]
    %v30 = vld [vmem:[%s1 + $0x28] sm:$0xff]
    %v31 = vld [vmem:[%s1 + $0x30] sm:$0xff]
    %v32 = vld [vmem:[%s1 + $0x38] sm:$0xff]
    %vm33 = vcmask 261120
    %v35 = vsel %vm33, %v21, 0
    %v38 = vsel %vm33, %v22, 0
    %40 = vmatprep.subr.mxu0 %v26
    %41 = vmatpush1.msra.mxu0 %v25
    %42 = vmatprep.subr.mxu0 %v28
    %43 = vmatpush1.msra.mxu0 %v27
    %44 = vmatprep.subr.mxu0 %v30
    %45 = vmatpush1.msra.mxu0 %v29
    %46 = vmatprep.subr.mxu0 %v32
    %47 = vmatpush1.msra.mxu0 %v31
    %48 = vmatprep.subr.mxu0 0.0
    %49 = vmatpush1.msra.mxu0 0.0
    %50 = vmatprep.subr.mxu0 0.0
    %51 = vmatpush1.msra.mxu0 0.0
    %52 = vmatprep.subr.mxu0 0.0
    %53 = vmatpush1.msra.mxu0 0.0
    %54 = vmatprep.subr.mxu0 0.0
    %55 = vmatpush1.msra.mxu0 0.0
    %56 = vmatprep.subr.mxu0 0.0
    %57 = vmatpush1.msra.mxu0 0.0
    %58 = vmatprep.subr.mxu0 0.0
    %59 = vmatpush1.msra.mxu0 0.0
    %60 = vmatprep.subr.mxu0 0.0
    %61 = vmatpush1.msra.mxu0 0.0
    %62 = vmatprep.subr.mxu0 0.0
    %63 = vmatpush1.msra.mxu0 0.0
    %64 = vmatprep.subr.mxu0 0.0
    %65 = vmatpush1.msra.mxu0 0.0
    %66 = vmatprep.subr.mxu0 0.0
    %67 = vmatpush1.msra.mxu0 0.0
    %68 = vmatprep.subr.mxu0 0.0
    %69 = vmatpush1.msra.mxu0 0.0
    %70 = vmatprep.subr.mxu0 0.0
    %71 = vmatpush1.msra.mxu0 0.0
    %72 = vmatprep.subr.mxu0 0.0
    %73 = vmatpush1.msra.mxu0 0.0
    %74 = vmatprep.subr.mxu0 0.0
    %75 = vmatpush1.msra.mxu0 0.0
    %76 = vmatprep.subr.mxu0 0.0
    %77 = vmatpush1.msra.mxu0 0.0
    %78 = vmatprep.subr.mxu0 0.0
    %79 = vmatpush1.msra.mxu0 0.0
    %80 = vmatprep.subr.mxu0 0.0
    %81 = vmatpush1.msra.mxu0 0.0
    %82 = vmatprep.subr.mxu0 0.0
    %83 = vmatpush1.msra.mxu0 0.0
    %84 = vmatprep.subr.mxu0 0.0
    %85 = vmatpush1.msra.mxu0 0.0
    %86 = vmatprep.subr.mxu0 0.0
    %87 = vmatpush1.msra.mxu0 0.0
    %88 = vmatprep.subr.mxu0 0.0
    %89 = vmatpush1.msra.mxu0 0.0
    %90 = vmatprep.subr.mxu0 0.0
    %91 = vmatpush1.msra.mxu0 0.0
    %92 = vmatprep.subr.mxu0 0.0
    %93 = vmatpush1.msra.mxu0 0.0
    %94 = vmatprep.subr.mxu0 0.0
    %95 = vmatpush1.msra.mxu0 0.0
    %96 = vmatprep.subr.mxu0 0.0
    %97 = vmatpush1.msra.mxu0 0.0
    %98 = vmatprep.subr.mxu0 0.0
    %99 = vmatpush1.msra.mxu0 0.0
    %100 = vmatprep.subr.mxu0 0.0
    %101 = vmatpush1.msra.mxu0 0.0
    %102 = vmatprep.subr.mxu0 0.0
    %103 = vmatpush1.msra.mxu0 0.0
    %104 = vmatprep.mubr.f32.mxu0 0.0
    %105 = vmatmul.mubr.f32.gmra.mrb[0].mxu0 %v35
    %v106 = vpop.f32.mrb[0].mxu0
    %v107 = vadd.f32 0.0, %v106
    %v108 = vpop.f32.mrb[0].mxu0
    %v109 = vadd.f32 0.0, %v108
    %110 = vmatprep.mubr.f32.mxu0 0.0
    %111 = vmatmul.mubr.f32.gmra.mrb[0].mxu0 %v38
    %v112 = vpop.f32.mrb[0].mxu0
    %v113 = vadd.f32 0.0, %v112
    %v114 = vpop.f32.mrb[0].mxu0
    %v115 = vadd.f32 0.0, %v114
    %116 = vdwg.mxu0
    %v117 = vmul.f32 %v107, %v23
    %v118 = vmul.f32 %v109, %v24
    %v119 = vmul.f32 %v113, %v23
    %v120 = vmul.f32 %v115, %v24
    %v121 = vrot.slane %v117, 4
    %v122 = vadd.f32 %v117, %v121
    %v123 = vrot.slane %v122, 2
    %v124 = vadd.f32 %v122, %v123
    %v125 = vrot.slane %v124, 1
    %v126 = vadd.f32 %v124, %v125
    %v127 = vrot.slane %v118, 4
    %v128 = vadd.f32 %v118, %v127
    %v129 = vrot.slane %v128, 2
    %v130 = vadd.f32 %v128, %v129
    %v131 = vrot.slane %v130, 1
    %v132 = vadd.f32 %v130, %v131
    %v133 = vrot.slane %v119, 4
    %v134 = vadd.f32 %v119, %v133
    %v135 = vrot.slane %v134, 2
    %v136 = vadd.f32 %v134, %v135
    %v137 = vrot.slane %v136, 1
    %v138 = vadd.f32 %v136, %v137
    %v139 = vrot.slane %v120, 4
    %v140 = vadd.f32 %v120, %v139
    %v141 = vrot.slane %v140, 2
    %v142 = vadd.f32 %v140, %v141
    %v143 = vrot.slane %v142, 1
    %v144 = vadd.f32 %v142, %v143
    %v145 = vadd.f32 %v107, %v126
    %v146 = vadd.f32 %v109, %v132
    %v147 = vadd.f32 %v113, %v138
    %v148 = vadd.f32 %v115, %v144
    %v149 = vtanh.pop %v145
    %v150 = vtanh.pop %v146
    %v151 = vtanh.pop %v147
    %v152 = vtanh.pop %v148
    %v153 = vld [vmem:[%s3] sm:$0xff]
    %v154 = vld [vmem:[%s3 + $0x8] sm:$0xff]
    %v155 = vld [vmem:[%s3 + $0x10] sm:$0xff]
    %v156 = vld [vmem:[%s3 + $0x18] sm:$0xff]
    %v157 = vld [vmem:[%s3 + $0x20] sm:$0xff]
    %v158 = vld [vmem:[%s3 + $0x28] sm:$0xff]
    %v159 = vld [vmem:[%s3 + $0x30] sm:$0xff]
    %v160 = vld [vmem:[%s3 + $0x38] sm:$0xff]
    %v161 = vld [vmem:[%s3 + $0x40] sm:$0xff]
    %v162 = vld [vmem:[%s3 + $0x48] sm:$0xff]
    %v163 = vld [vmem:[%s3 + $0x50] sm:$0xff]
    %v164 = vld [vmem:[%s3 + $0x58] sm:$0xff]
    %v165 = vld [vmem:[%s3 + $0x60] sm:$0xff]
    %v166 = vld [vmem:[%s3 + $0x68] sm:$0xff]
    %v167 = vld [vmem:[%s3 + $0x70] sm:$0xff]
    %v168 = vld [vmem:[%s3 + $0x78] sm:$0xff]
    %v169 = vld [vmem:[%s3 + $0x80] sm:$0xff]
    %v170 = vld [vmem:[%s3 + $0x88] sm:$0xff]
    %v171 = vld [vmem:[%s3 + $0x90] sm:$0xff]
    %v172 = vld [vmem:[%s3 + $0x98] sm:$0xff]
    %v173 = vld [vmem:[%s3 + $0xa0] sm:$0xff]
    %v174 = vld [vmem:[%s3 + $0xa8] sm:$0xff]
    %v175 = vld [vmem:[%s3 + $0xb0] sm:$0xff]
    %v176 = vld [vmem:[%s3 + $0xb8] sm:$0xff]
    %v177 = vld [vmem:[%s3 + $0xc0] sm:$0xff]
    %v178 = vld [vmem:[%s3 + $0xc8] sm:$0xff]
    %v179 = vld [vmem:[%s3 + $0xd0] sm:$0xff]
    %v180 = vld [vmem:[%s3 + $0xd8] sm:$0xff]
    %v181 = vld [vmem:[%s3 + $0xe0] sm:$0xff]
    %v182 = vld [vmem:[%s3 + $0xe8] sm:$0xff]
    %v183 = vld [vmem:[%s3 + $0xf0] sm:$0xff]
    %v184 = vld [vmem:[%s3 + $0xf8] sm:$0xff]
    %185 = vmatprep.subr.mxu0 0.0
    %186 = vmatpush1.msra.mxu0 %v153
    %187 = vmatprep.subr.mxu0 0.0
    %188 = vmatpush1.msra.mxu0 %v154
    %189 = vmatprep.subr.mxu0 0.0
    %190 = vmatpush1.msra.mxu0 %v155
    %191 = vmatprep.subr.mxu0 0.0
    %192 = vmatpush1.msra.mxu0 %v156
    %193 = vmatprep.subr.mxu0 0.0
    %194 = vmatpush1.msra.mxu0 %v157
    %195 = vmatprep.subr.mxu0 0.0
    %196 = vmatpush1.msra.mxu0 %v158
    %197 = vmatprep.subr.mxu0 0.0
    %198 = vmatpush1.msra.mxu0 %v159
    %199 = vmatprep.subr.mxu0 0.0
    %200 = vmatpush1.msra.mxu0 %v160
    %201 = vmatprep.subr.mxu0 0.0
    %202 = vmatpush1.msra.mxu0 %v161
    %203 = vmatprep.subr.mxu0 0.0
    %204 = vmatpush1.msra.mxu0 %v162
    %205 = vmatprep.subr.mxu0 0.0
    %206 = vmatpush1.msra.mxu0 %v163
    %207 = vmatprep.subr.mxu0 0.0
    %208 = vmatpush1.msra.mxu0 %v164
    %209 = vmatprep.subr.mxu0 0.0
    %210 = vmatpush1.msra.mxu0 %v165
    %211 = vmatprep.subr.mxu0 0.0
    %212 = vmatpush1.msra.mxu0 %v166
    %213 = vmatprep.subr.mxu0 0.0
    %214 = vmatpush1.msra.mxu0 %v167
    %215 = vmatprep.subr.mxu0 0.0
    %216 = vmatpush1.msra.mxu0 %v168
    %217 = vmatprep.subr.mxu0 0.0
    %218 = vmatpush1.msra.mxu0 %v169
    %219 = vmatprep.subr.mxu0 0.0
    %220 = vmatpush1.msra.mxu0 %v170
    %221 = vmatprep.subr.mxu0 0.0
    %222 = vmatpush1.msra.mxu0 %v171
    %223 = vmatprep.subr.mxu0 0.0
    %224 = vmatpush1.msra.mxu0 %v172
    %225 = vmatprep.subr.mxu0 0.0
    %226 = vmatpush1.msra.mxu0 %v173
    %227 = vmatprep.subr.mxu0 0.0
    %228 = vmatpush1.msra.mxu0 %v174
    %229 = vmatprep.subr.mxu0 0.0
    %230 = vmatpush1.msra.mxu0 %v175
    %231 = vmatprep.subr.mxu0 0.0
    %232 = vmatpush1.msra.mxu0 %v176
    %233 = vmatprep.subr.mxu0 0.0
    %234 = vmatpush1.msra.mxu0 %v177
    %235 = vmatprep.subr.mxu0 0.0
    %236 = vmatpush1.msra.mxu0 %v178
    %237 = vmatprep.subr.mxu0 0.0
    %238 = vmatpush1.msra.mxu0 %v179
    %239 = vmatprep.subr.mxu0 0.0
    %240 = vmatpush1.msra.mxu0 %v180
    %241 = vmatprep.subr.mxu0 0.0
    %242 = vmatpush1.msra.mxu0 %v181
    %243 = vmatprep.subr.mxu0 0.0
    %244 = vmatpush1.msra.mxu0 %v182
    %245 = vmatprep.subr.mxu0 0.0
    %246 = vmatpush1.msra.mxu0 %v183
    %247 = vmatprep.subr.mxu0 0.0
    %248 = vmatpush1.msra.mxu0 %v184
    %249 = vmatprep.mubr.f32.mxu0 %v150
    %250 = vmatmul.mubr.f32.gmra.mrb[0].mxu0 %v149
    %v251 = vpop.f32.mrb[0].mxu0
    %v252 = vadd.f32 0.0, %v251
    %v253 = vpop.f32.mrb[0].mxu0
    %254 = vmatprep.mubr.f32.mxu0 %v152
    %255 = vmatmul.mubr.f32.gmra.mrb[0].mxu0 %v151
    %v256 = vpop.f32.mrb[0].mxu0
    %v257 = vadd.f32 0.0, %v256
    %v258 = vpop.f32.mrb[0].mxu0
    %259 = vdwg.mxu0
    %vm260 = vcmask 64512
    %v261 = vsel %vm260, %v252, -inf
    %v262 = vrot.slane %v261, 4
    %v263 = vmax.f32 %v261, %v262
    %v264 = vrot.slane %v263, 2
    %v265 = vmax.f32 %v263, %v264
    %v266 = vrot.slane %v265, 1
    %v267 = vmax.f32 %v265, %v266
    %v268 = vsel %vm260, %v257, -inf
    %v269 = vrot.slane %v268, 4
    %v270 = vmax.f32 %v268, %v269
    %v271 = vrot.slane %v270, 2
    %v272 = vmax.f32 %v270, %v271
    %v273 = vrot.slane %v272, 1
    %v274 = vmax.f32 %v272, %v273
    %v275 = vsub.f32 %v252, %v267
    %v276 = vsub.f32 %v257, %v274
    %v277 = vmul.f32 %v275, 1.442695
    %v278 = vpow.pop %v277
    %v279 = vmul.f32 %v276, 1.442695
    %v280 = vpow.pop %v279
    %v281 = vsel %vm260, %v278, 0.0
    %v282 = vrot.slane %v281, 4
    %v283 = vadd.f32 %v281, %v282
    %v284 = vrot.slane %v283, 2
    %v285 = vadd.f32 %v283, %v284
    %v286 = vrot.slane %v285, 1
    %v287 = vadd.f32 %v285, %v286
    %v288 = vsel %vm260, %v280, 0.0
    %v289 = vrot.slane %v288, 4
    %v290 = vadd.f32 %v288, %v289
    %v291 = vrot.slane %v290, 2
    %v292 = vadd.f32 %v290, %v291
    %v293 = vrot.slane %v292, 1
    %v294 = vadd.f32 %v292, %v293
    %v295 = vrcp.pop %v287
    %v296 = vrcp.pop %v294
    %v297 = vmul.f32 %v278, %v295
    %v298 = vmul.f32 %v280, %v296
    %v300 = vsel %vm260, %v297, 0
    %v303 = vsel %vm260, %v298, 0
    %305 = vmatprep.subr.mxu0 %v24
    %306 = vmatpush1.msra.mxu0 %v23
    %307 = vmatprep.subr.mxu0 0.0
    %308 = vmatpush1.msra.mxu0 0.0
    %309 = vmatprep.subr.mxu0 0.0
    %310 = vmatpush1.msra.mxu0 0.0
    %311 = vmatprep.subr.mxu0 0.0
    %312 = vmatpush1.msra.mxu0 0.0
    %313 = vmatprep.subr.mxu0 0.0
    %314 = vmatpush1.msra.mxu0 0.0
    %315 = vmatprep.subr.mxu0 0.0
    %316 = vmatpush1.msra.mxu0 0.0
    %317 = vmatprep.subr.mxu0 0.0
    %318 = vmatpush1.msra.mxu0 0.0
    %319 = vmatprep.subr.mxu0 0.0
    %320 = vmatpush1.msra.mxu0 0.0
    %321 = vmatprep.subr.mxu0 0.0
    %322 = vmatpush1.msra.mxu0 0.0
    %323 = vmatprep.subr.mxu0 0.0
    %324 = vmatpush1.msra.mxu0 0.0
    %325 = vmatprep.subr.mxu0 0.0
    %326 = vmatpush1.msra.mxu0 0.0
    %327 = vmatprep.subr.mxu0 0.0
    %328 = vmatpush1.msra.mxu0 0.0
    %329 = vmatprep.subr.mxu0 0.0
    %330 = vmatpush1.msra.mxu0 0.0
    %331 = vmatprep.subr.mxu0 0.0
    %332 = vmatpush1.msra.mxu0 0.0
    %333 = vmatprep.subr.mxu0 0.0
    %334 = vmatpush1.msra.mxu0 0.0
    %335 = vmatprep.subr.mxu0 0.0
    %336 = vmatpush1.msra.mxu0 0.0
    %337 = vmatprep.subr.mxu0 0.0
    %338 = vmatpush1.msra.mxu0 0.0
    %339 = vmatprep.subr.mxu0 0.0
    %340 = vmatpush1.msra.mxu0 0.0
    %341 = vmatprep.subr.mxu0 0.0
    %342 = vmatpush1.msra.mxu0 0.0
    %343 = vmatprep.subr.mxu0 0.0
    %344 = vmatpush1.msra.mxu0 0.0
    %345 = vmatprep.subr.mxu0 0.0
    %346 = vmatpush1.msra.mxu0 0.0
    %347 = vmatprep.subr.mxu0 0.0
    %348 = vmatpush1.msra.mxu0 0.0
    %349 = vmatprep.subr.mxu0 0.0
    %350 = vmatpush1.msra.mxu0 0.0
    %351 = vmatprep.subr.mxu0 0.0
    %352 = vmatpush1.msra.mxu0 0.0
    %353 = vmatprep.subr.mxu0 0.0
    %354 = vmatpush1.msra.mxu0 0.0
    %355 = vmatprep.subr.mxu0 0.0
    %356 = vmatpush1.msra.mxu0 0.0
    %357 = vmatprep.subr.mxu0 0.0
    %358 = vmatpush1.msra.mxu0 0.0
    %359 = vmatprep.subr.mxu0 0.0
    %360 = vmatpush1.msra.mxu0 0.0
    %361 = vmatprep.subr.mxu0 0.0
    %362 = vmatpush1.msra.mxu0 0.0
    %363 = vmatprep.subr.mxu0 0.0
    %364 = vmatpush1.msra.mxu0 0.0
    %365 = vmatprep.subr.mxu0 0.0
    %366 = vmatpush1.msra.mxu0 0.0
    %367 = vmatprep.subr.mxu0 0.0
    %368 = vmatpush1.msra.mxu0 0.0
    %369 = vmatprep.mubr.f32.mxu0 0.0
    %370 = vmatmul.mubr.f32.gmra.mrb[0].mxu0 %v300
    %v371 = vpop.f32.mrb[0].mxu0
    %v372 = vadd.f32 0.0, %v371
    %v373 = vpop.f32.mrb[0].mxu0
    %v374 = vadd.f32 0.0, %v373
    %375 = vmatprep.mubr.f32.mxu0 0.0
    %376 = vmatmul.mubr.f32.gmra.mrb[0].mxu0 %v303
    %v377 = vpop.f32.mrb[0].mxu0
    %v378 = vadd.f32 0.0, %v377
    %v379 = vpop.f32.mrb[0].mxu0
    %v380 = vadd.f32 0.0, %v379
    %381 = vdwg.mxu0
    %v382 = vld [vmem:[%s4] sm:$0xff]
    %v383 = vld [vmem:[%s4 + $0x8] sm:$0xff]
    %v384 = vld [vmem:[%s4 + $0x10] sm:$0xff]
    %v385 = vld [vmem:[%s4 + $0x18] sm:$0xff]
    %v386 = vld [vmem:[%s4 + $0x20] sm:$0xff]
    %v387 = vld [vmem:[%s4 + $0x28] sm:$0xff]
    %v388 = vld [vmem:[%s4 + $0x30] sm:$0xff]
    %v389 = vld [vmem:[%s4 + $0x38] sm:$0xff]
    %390 = vmatprep.subr.mxu0 %v383
    %391 = vmatpush1.msra.mxu0 %v382
    %392 = vmatprep.subr.mxu0 %v385
    %393 = vmatpush1.msra.mxu0 %v384
    %394 = vmatprep.subr.mxu0 %v387
    %395 = vmatpush1.msra.mxu0 %v386
    %396 = vmatprep.subr.mxu0 %v389
    %397 = vmatpush1.msra.mxu0 %v388
    %398 = vmatprep.subr.mxu0 0.0
    %399 = vmatpush1.msra.mxu0 0.0
    %400 = vmatprep.subr.mxu0 0.0
    %401 = vmatpush1.msra.mxu0 0.0
    %402 = vmatprep.subr.mxu0 0.0
    %403 = vmatpush1.msra.mxu0 0.0
    %404 = vmatprep.subr.mxu0 0.0
    %405 = vmatpush1.msra.mxu0 0.0
    %406 = vmatprep.subr.mxu0 0.0
    %407 = vmatpush1.msra.mxu0 0.0
    %408 = vmatprep.subr.mxu0 0.0
    %409 = vmatpush1.msra.mxu0 0.0
    %410 = vmatprep.subr.mxu0 0.0
    %411 = vmatpush1.msra.mxu0 0.0
    %412 = vmatprep.subr.mxu0 0.0
    %413 = vmatpush1.msra.mxu0 0.0
    %414 = vmatprep.subr.mxu0 0.0
    %415 = vmatpush1.msra.mxu0 0.0
    %416 = vmatprep.subr.mxu0 0.0
    %417 = vmatpush1.msra.mxu0 0.0
    %418 = vmatprep.subr.mxu0 0.0
    %419 = vmatpush1.msra.mxu0 0.0
    %420 = vmatprep.subr.mxu0 0.0
    %421 = vmatpush1.msra.mxu0 0.0
    %422 = vmatprep.subr.mxu0 0.0
    %423 = vmatpush1.msra.mxu0 0.0
    %424 = vmatprep.subr.mxu0 0.0
    %425 = vmatpush1.msra.mxu0 0.0
    %426 = vmatprep.subr.mxu0 0.0
    %427 = vmatpush1.msra.mxu0 0.0
    %428 = vmatprep.subr.mxu0 0.0
    %429 = vmatpush1.msra.mxu0 0.0
    %430 = vmatprep.subr.mxu0 0.0
    %431 = vmatpush1.msra.mxu0 0.0
    %432 = vmatprep.subr.mxu0 0.0
    %433 = vmatpush1.msra.mxu0 0.0
    %434 = vmatprep.subr.mxu0 0.0
    %435 = vmatpush1.msra.mxu0 0.0
    %436 = vmatprep.subr.mxu0 0.0
    %437 = vmatpush1.msra.mxu0 0.0
    %438 = vmatprep.subr.mxu0 0.0
    %439 = vmatpush1.msra.mxu0 0.0
    %440 = vmatprep.subr.mxu0 0.0
    %441 = vmatpush1.msra.mxu0 0.0
    %442 = vmatprep.subr.mxu0 0.0
    %443 = vmatpush1.msra.mxu0 0.0
    %444 = vmatprep.subr.mxu0 0.0
    %445 = vmatpush1.msra.mxu0 0.0
    %446 = vmatprep.subr.mxu0 0.0
    %447 = vmatpush1.msra.mxu0 0.0
    %448 = vmatprep.subr.mxu0 0.0
    %449 = vmatpush1.msra.mxu0 0.0
    %450 = vmatprep.subr.mxu0 0.0
    %451 = vmatpush1.msra.mxu0 0.0
    %452 = vmatprep.subr.mxu0 0.0
    %453 = vmatpush1.msra.mxu0 0.0
    %454 = vmatprep.mubr.f32.mxu0 0.0
    %455 = vmatmul.mubr.f32.gmra.mrb[0].mxu0 %v35
    %v456 = vpop.f32.mrb[0].mxu0
    %v457 = vadd.f32 0.0, %v456
    %v458 = vpop.f32.mrb[0].mxu0
    %v459 = vadd.f32 0.0, %v458
    %460 = vmatprep.mubr.f32.mxu0 0.0
    %461 = vmatmul.mubr.f32.gmra.mrb[0].mxu0 %v38
    %v462 = vpop.f32.mrb[0].mxu0
    %v463 = vadd.f32 0.0, %v462
    %v464 = vpop.f32.mrb[0].mxu0
    %v465 = vadd.f32 0.0, %v464
    %466 = vdwg.mxu0
    %v467 = vmul.f32 %v372, %v457
    %v468 = vmul.f32 %v374, %v459
    %v469 = vmul.f32 %v378, %v463
    %v470 = vmul.f32 %v380, %v465
    %v471 = vrot.slane %v467, 4
    %v472 = vadd.f32 %v467, %v471
    %v473 = vrot.slane %v472, 2
    %v474 = vadd.f32 %v472, %v473
    %v475 = vrot.slane %v474, 1
    %v476 = vadd.f32 %v474, %v475
    %v477 = vrot.slane %v468, 4
    %v478 = vadd.f32 %v468, %v477
    %v479 = vrot.slane %v478, 2
    %v480 = vadd.f32 %v478, %v479
    %v481 = vrot.slane %v480, 1
    %v482 = vadd.f32 %v480, %v481
    %v483 = vrot.slane %v469, 4
    %v484 = vadd.f32 %v469, %v483
    %v485 = vrot.slane %v484, 2
    %v486 = vadd.f32 %v484, %v485
    %v487 = vrot.slane %v486, 1
    %v488 = vadd.f32 %v486, %v487
    %v489 = vrot.slane %v470, 4
    %v490 = vadd.f32 %v470, %v489
    %v491 = vrot.slane %v490, 2
    %v492 = vadd.f32 %v490, %v491
    %v493 = vrot.slane %v492, 1
    %v494 = vadd.f32 %v492, %v493
    %v499 = vcombine.low %v476, %v482
    %v501 = vunpack.c.l.s4 1983009808
    %v502 = vunpack.c.0.s8 %v501
    %v503 = vlaneseq
    %v504 = vshrl.u32 %v503, 7
    %v505 = vsub.s32 %v502, %v504
    %v506 = vrot.slane %v499, %v505
    %v507 = vcombine.low %v488, %v494
    %v509 = vunpack.c.l.s4 1983009808
    %v510 = vunpack.c.0.s8 %v509
    %v511 = vlaneseq
    %v512 = vshrl.u32 %v511, 7
    %v513 = vsub.s32 %v510, %v512
    %v514 = vrot.slane %v507, %v513
    %vm515 = vcmask 1044484
    %v516 = vsel %vm515, %v506, %v506
    %vm517 = vcmask 1046534
    %v518 = vsel %vm517, %v506, %v516
    %v519 = vrot.slane %v514, 7
    %vm520 = vcmask 1041409
    %v521 = vsel %vm520, %v519, %v518
    %vm522 = vcmask 1043459
    %v523 = vsel %vm522, %v519, %v521
    %vm524 = vcmask 1045509
    %v525 = vsel %vm524, %v519, %v523
    %vm526 = vcmask 1047559
    %v527 = vsel %vm526, %v519, %v525
    %529 = vst [vmem:[#allocation2] sm:$0xf] %v527
    // Predicated region
    $region22: #{tpu_custom_call.1} parent=1 // pred_check
      _
    $region23: #{tpu_custom_call.1} parent=1 // pred_check_branch
      %531 = sbr.rel (0) target = $region25
    $region24: #{tpu_custom_call.1} parent=1 // pred_region
      %s533 = ssub.s32 64, 64
      %534 = vsyncadd [#allocation3], %s533
      %s536 = sshll.u32 [#allocation2], 4
      %s537 = int_to_ptr.vmem [resolvable:$true] %s536
      %539 = dma.vmem_to_hbm [thread:$0]  %s537, 64, %s5, [#allocation3]
    $region25: #{tpu_custom_call.1} parent=1 // pred_fallthru
      _
    // Predicated region
    $region26: #{tpu_custom_call.1} parent=1 // pred_check
      _
    $region27: #{tpu_custom_call.1} parent=1 // pred_check_branch
      %541 = sbr.rel (0) target = $region29
    $region28: #{tpu_custom_call.1} parent=1 // pred_region
      %542 = dma.done [#allocation3], 64
    $region29: #{tpu_custom_call.1} parent=1 // pred_fallthru
      _
    %543 = vsyncpa [#allocation3], 1

</llo_original>
